<compile_context>
chip_gen: v7x
topology: tpu7x:2x2x1
jax: 0.10.0
libtpu: 0.0.40
codegen_flags: <defaults>
</compile_context>

<pallas_src>
from functools import partial

import jax
import jax.numpy as jnp
from jax.experimental import pallas as pl
from jax.experimental.pallas import tpu as pltpu

_LANE = 128            # single-vreg lane width (small-input fallback)
_WIDE_LANES = 512      # lane-dense slab width for large inputs (multiple of 128)
_SUBLANE = 32          # row multiple valid for 4/2/1-byte dtypes (8/16/32 min sublanes)
_MAX_BLOCK_ROWS = 1024 # 1024 x 512 x 4 B = 2 MiB per f32 block


# ----------------------------------------------------------------------------
# Pallas kernel: elementwise tempered sigmoid (or hard threshold when t == 0)
# ----------------------------------------------------------------------------
def _tempered_sigmoid_kernel(inv_t_ref, p_ref, o_ref, *, hard):
    p = p_ref[...]
    if hard:
        # temperature == 0: (p >= 0) cast back to p's dtype.
        o_ref[...] = (p >= 0).astype(o_ref.dtype)
    else:
        inv_t = inv_t_ref[0]                                  # scalar from SMEM
        x = p.astype(jnp.float32) * inv_t                     # p / temperature
        o_ref[...] = jax.nn.sigmoid(x).astype(o_ref.dtype)    # 1/(1+exp(-x)); exp on EUP


# ----------------------------------------------------------------------------
# Wrapper: flatten to a lane-dense slab, run one pallas_call, un-flatten
# ----------------------------------------------------------------------------
@partial(jax.jit, static_argnames=("hard",))
def _tempered_sigmoid_forward(p, inv_t, hard):
    orig_shape = p.shape
    orig_dtype = p.dtype
    n = p.size

    # Wide slab for large inputs (bigger, fully lane-dense tiles); single-vreg
    # width for tiny inputs to bound padding.  Both are multiples of 128.
    lanes = _WIDE_LANES if n >= _WIDE_LANES * _SUBLANE else _LANE

    # Choose a row block (multiple of 32) and pad the flattened input so the
    # (rows, lanes) slab tiles exactly: no partial blocks, no masked stores.
    rows = pl.cdiv(n, lanes)
    block_rows = min(pl.cdiv(rows, _SUBLANE) * _SUBLANE, _MAX_BLOCK_ROWS)
    rows = pl.cdiv(rows, block_rows) * block_rows
    n_pad = rows * lanes

    flat = jnp.ravel(p)
    if n_pad != n:
        flat = jnp.pad(flat, (0, n_pad - n))
    x2d = flat.reshape(rows, lanes)

    inv_t_arr = jnp.reshape(inv_t.astype(jnp.float32), (1,))
    grid = (rows // block_rows,)

    out2d = pl.pallas_call(
        partial(_tempered_sigmoid_kernel, hard=hard),
        out_shape=jax.ShapeDtypeStruct((rows, lanes), orig_dtype),
        grid=grid,
        in_specs=[
            pl.BlockSpec(memory_space=pltpu.MemorySpace.SMEM),      # (1,) 1/t scalar
            pl.BlockSpec((block_rows, lanes), lambda i: (i, 0)),    # lane-dense tile
        ],
        out_specs=pl.BlockSpec((block_rows, lanes), lambda i: (i, 0)),
        compiler_params=pltpu.CompilerParams(
            dimension_semantics=("parallel",)),   # shard row-blocks across TCs (v7x)
    )(inv_t_arr, x2d)

    out_flat = out2d.reshape(-1)
    if n_pad != n:
        out_flat = out_flat[:n]
    return out_flat.reshape(orig_shape)


# ----------------------------------------------------------------------------
# Module port (mirrors the PyTorch class, incl. the Python-level t==0 branch)
# ----------------------------------------------------------------------------
class TemperedSigmoidGate:
    def __init__(self, temperature):
        self.temperature = temperature

    @property
    def temperature(self):
        return self._temperature

    @temperature.setter
    def temperature(self, t):
        assert t >= 0
        self._temperature = t

    def __call__(self, p):
        if self._temperature == 0:
            return _tempered_sigmoid_forward(p, jnp.float32(0.0), True)
        inv_t = jnp.float32(1.0 / float(self._temperature))
        return _tempered_sigmoid_forward(p, inv_t, False)

    # alias matching nn.Module.forward
    forward = __call__


# ----------------------------------------------------------------------------
# Main
# ----------------------------------------------------------------------------
if __name__ == "__main__":
    key = jax.random.PRNGKey(0)
    p = jax.random.normal(key, (2, 4, 16, 16), dtype=jnp.float32) * 3.0

    temperature = 0.5
    gate = TemperedSigmoidGate(temperature)

    out = gate(p)                       # tempered-sigmoid path
    jax.block_until_ready(out)

    ref = jax.nn.sigmoid(p / temperature)
    assert out.shape == p.shape and out.dtype == p.dtype
    assert bool(jnp.allclose(out, ref, atol=1e-6, rtol=1e-6))

    gate.temperature = 0                # hard-threshold path
    out0 = gate(p)
    jax.block_until_ready(out0)
    ref0 = (p >= 0).astype(p.dtype)
    assert bool(jnp.array_equal(out0, ref0))

    print("KERNEL_OK")
</pallas_src>

<mosaic_0001>
module attributes {stable_mosaic.version = 11 : i64} {
  func.func @_tempered_sigmoid_kernel(%arg0: i32, %arg1: memref<1xf32, #tpu.memory_space<smem>>, %arg2: memref<32x128xf32, #tpu.memory_space<vmem>>, %arg3: memref<32x128xf32, #tpu.memory_space<vmem>>) attributes {dimension_semantics = [#tpu.dimension_semantics<parallel>], iteration_bounds = array<i64: 1>, scalar_prefetch = 0 : i64, scratch_operands = 0 : i64, tpu.core_type = #tpu.core_type<tc>, window_params = [{transform_indices = @transform_0, window_bounds = array<i64: 1>}, {transform_indices = @transform_1, window_bounds = array<i64: 32, 128>}, {transform_indices = @transform_2, window_bounds = array<i64: 32, 128>}]} {
    %c0 = arith.constant 0 : index
    %c0_0 = arith.constant 0 : index
    %0 = vector.load %arg2[%c0, %c0_0] : memref<32x128xf32, #tpu.memory_space<vmem>>, vector<32x128xf32>
    %c0_1 = arith.constant 0 : index
    %1 = memref.load %arg1[%c0_1] : memref<1xf32, #tpu.memory_space<smem>>
    %2 = vector.broadcast %1 : f32 to vector<32x128xf32>
    %3 = arith.mulf %0, %2 : vector<32x128xf32>
    %4 = arith.negf %3 : vector<32x128xf32>
    %5 = math.exp %4 : vector<32x128xf32>
    %cst = arith.constant 1.000000e+00 : f32
    %6 = vector.broadcast %cst : f32 to vector<32x128xf32>
    %7 = arith.addf %6, %5 : vector<32x128xf32>
    %8 = arith.divf %6, %7 : vector<32x128xf32>
    %c0_2 = arith.constant 0 : index
    %c0_3 = arith.constant 0 : index
    %9 = vector.load %arg3[%c0_2, %c0_3] : memref<32x128xf32, #tpu.memory_space<vmem>>, vector<32x128xf32>
    tpu.vector_store %arg3[%c0_2, %c0_3], %8 {strides = array<i32>} : memref<32x128xf32, #tpu.memory_space<vmem>>, vector<32x128xf32>,
    return
  }
  func.func @transform_0(%arg0: i32) -> i32 {
    %c0_i32 = arith.constant 0 : i32
    %c0_i32_0 = arith.constant 0 : i32
    return %c0_i32 : i32
  }
  func.func @transform_1(%arg0: i32) -> (i32, i32) {
    %c0_i32 = arith.constant 0 : i32
    %c0_i32_0 = arith.constant 0 : i32
    return %arg0, %c0_i32 : i32, i32
  }
  func.func @transform_2(%arg0: i32) -> (i32, i32) {
    %c0_i32 = arith.constant 0 : i32
    %c0_i32_0 = arith.constant 0 : i32
    return %arg0, %c0_i32 : i32, i32
  }
}

</mosaic_0001>

<llo_original>
// kernel: _tempered_sigmoid_forward.1
$region0: #{_tempered_sigmoid_forward.1}
  #allocation0 [shape = 'u32[]', space=smem, size = 0x4, offset = 0x4, fixed_abs, tag = 'smem constant byte address 0x4 - core index']
  #allocation1 [shape = 'u32[144,128]{1,0:T(1,128)}', space=vmem, size = 0x12000, scoped, tag = 'internal scratch']
  #allocation2 [shape = 'f32[1]{0:T(128)S(6)}', space=smem, size = 0x200, scoped, tag = 'scoped memory for _tempered_sigmoid_forward.1']
  %s0 = inlined_call_operand.<no memory space> [shape: f32[1], index: 0, kind: input, shape index: {}]
  %s1 = inlined_call_operand.vmem [shape: f32[32,128], index: 1, kind: input, shape index: {}]
  %s2 = inlined_call_operand.vmem [shape: f32[32,128], index: 2, kind: output, shape index: {}]
  %s3 = sld [smem:[#allocation0]]
  $region18: #{_tempered_sigmoid_forward.1} parent=0
    _
  %s5 = ssub.s32 1, %s3
  %s6 = scalar_select 0, %s5, %s3
  %7 = sst [smem:[#allocation2]] %s0
  // Predicated region
  $region2: #{_tempered_sigmoid_forward.1} parent=0 // pred_check
    _
  $region3: #{_tempered_sigmoid_forward.1} parent=0 // pred_check_branch
    %9 = sbr.rel (0) target = $region5
  $region4: #{_tempered_sigmoid_forward.1} parent=0 // pred_region
    _
  $region5: #{_tempered_sigmoid_forward.1} parent=0 // pred_fallthru
    _
  // Predicated region
  $region6: #{_tempered_sigmoid_forward.1} parent=0 // pred_check
    _
  $region7: #{_tempered_sigmoid_forward.1} parent=0 // pred_check_branch
    %11 = sbr.rel (0) target = $region9
  $region8: #{_tempered_sigmoid_forward.1} parent=0 // pred_region
    _
  $region9: #{_tempered_sigmoid_forward.1} parent=0 // pred_fallthru
    _
  %v12 = vld [vmem:[%s1] sm:$0xff]
  %v13 = vld [vmem:[%s1 + $0x8] sm:$0xff]
  %v14 = vld [vmem:[%s1 + $0x10] sm:$0xff]
  %v15 = vld [vmem:[%s1 + $0x18] sm:$0xff]
  %s16 = sld [smem:[#allocation2]]
  %v17 = vstv %s16
  %v18 = vmul.f32 %v12, %v17
  %v19 = vmul.f32 %v13, %v17
  %v20 = vmul.f32 %v14, %v17
  %v21 = vmul.f32 %v15, %v17
  %v22 = vxor.u32 %v18, 2147483648
  %v23 = vxor.u32 %v19, 2147483648
  %v24 = vxor.u32 %v20, 2147483648
  %v25 = vxor.u32 %v21, 2147483648
  %v26 = vmul.f32 %v22, 1.442695
  %v27 = vpow.pop %v26
  %v28 = vmul.f32 %v23, 1.442695
  %v29 = vpow.pop %v28
  %v30 = vmul.f32 %v24, 1.442695
  %v31 = vpow.pop %v30
  %v32 = vmul.f32 %v25, 1.442695
  %v33 = vpow.pop %v32
  %v34 = vadd.f32 %v27, 1.0
  %v35 = vadd.f32 %v29, 1.0
  %v36 = vadd.f32 %v31, 1.0
  %v37 = vadd.f32 %v33, 1.0
  %v38 = vrcp.pop %v34
  %v39 = vmul.f32 1.0, %v38
  %v40 = vrcp.pop %v35
  %v41 = vmul.f32 1.0, %v40
  %v42 = vrcp.pop %v36
  %v43 = vmul.f32 1.0, %v42
  %v44 = vrcp.pop %v37
  %v45 = vmul.f32 1.0, %v44
  %46 = vst [vmem:[%s2] sm:$0xff] %v39
  %47 = vst [vmem:[%s2 + $0x8] sm:$0xff] %v41
  %48 = vst [vmem:[%s2 + $0x10] sm:$0xff] %v43
  %49 = vst [vmem:[%s2 + $0x18] sm:$0xff] %v45
  // Predicated region
  $region10: #{_tempered_sigmoid_forward.1} parent=0 // pred_check
    _
  $region11: #{_tempered_sigmoid_forward.1} parent=0 // pred_check_branch
    %51 = sbr.rel (0) target = $region13
  $region12: #{_tempered_sigmoid_forward.1} parent=0 // pred_region
    _
  $region13: #{_tempered_sigmoid_forward.1} parent=0 // pred_fallthru
    _
  // Predicated region
  $region14: #{_tempered_sigmoid_forward.1} parent=0 // pred_check
    _
  $region15: #{_tempered_sigmoid_forward.1} parent=0 // pred_check_branch
    %53 = sbr.rel (0) target = $region17
  $region16: #{_tempered_sigmoid_forward.1} parent=0 // pred_region
    _
  $region17: #{_tempered_sigmoid_forward.1} parent=0 // pred_fallthru
    _

</llo_original>
